<compile_context>
chip_gen: v6e
topology: v6e:2x2x1
jax: 0.10.0
libtpu: 0.0.40
codegen_flags: <defaults>
</compile_context>

<pallas_src>
import functools

import jax
import jax.numpy as jnp
from jax.experimental import pallas as pl
from jax.experimental.pallas import tpu as pltpu


def _vdp_batchnorm_kernel(mu_ref, sigma_ref, mu_bn_ref, sigma_bn_ref, *, eps, n):
    # Block view: (N, TILE_C). Everything elementwise in f32; one shared
    # cross-sublane (axis-0) reduction feeds both variances.
    mu = mu_ref[...].astype(jnp.float32)          # (N, Tc)
    sigma = sigma_ref[...].astype(jnp.float32)    # (N, Tc)

    inv_n = jnp.float32(1.0 / n)
    inv_nm1 = jnp.float32(1.0 / (n - 1))
    eps_f = jnp.float32(eps)

    mean = jnp.sum(mu, axis=0, keepdims=True) * inv_n      # (1, Tc)
    diff = mu - mean                                        # (N, Tc)
    sq_sum = jnp.sum(diff * diff, axis=0, keepdims=True)    # (1, Tc) one XLU reduce

    # BatchNorm (training mode) uses BIASED variance (divide by N).
    var_biased = sq_sum * inv_n
    mu_bn = diff * jax.lax.rsqrt(var_biased + eps_f)        # EUP rsqrt (free slot)

    # torch.var(mu, 0) is UNBIASED (divide by N-1). Exact division: the kernel
    # is HBM-bound, so the exact reciprocal costs no wall-clock but removes the
    # ~1e-4 relative deviation the approx EUP reciprocal introduced.
    var_unbiased = sq_sum * inv_nm1
    sigma_bn = sigma / (var_unbiased + eps_f)

    mu_bn_ref[...] = mu_bn.astype(mu_bn_ref.dtype)
    sigma_bn_ref[...] = sigma_bn.astype(sigma_bn_ref.dtype)


_FALLBACK_VMEM_CAPACITY = 64 * 1024 * 1024  # conservative (v7x per-TC physical)


def _vmem_capacity_bytes():
    """Best-effort query of per-core VMEM capacity; conservative fallback."""
    try:
        cap = int(pltpu.get_tpu_info().vmem_capacity_bytes)
        if cap > 0:
            return cap
    except Exception:
        pass
    return _FALLBACK_VMEM_CAPACITY


def _choose_tile_c(c_pad, n, in_itemsize, out_itemsize, budget):
    """Largest multiple-of-128 divisor of c_pad whose footprint fits `budget`.

    Footprint model per lane of the feature tile:
      - 2 input operands,  double-buffered:  2 * 2 * n * in_itemsize
      - 2 output operands, double-buffered:  2 * 2 * n * out_itemsize
      - f32 intermediates (mu/sigma casts, diff, products), single-buffered:
        ~4 * n * 4 bytes
    """
    assert c_pad % 128 == 0
    bytes_per_lane = (2 * 2 * n * in_itemsize
                      + 2 * 2 * n * out_itemsize
                      + 4 * n * 4)
    max_tile = max(128, (budget // bytes_per_lane) // 128 * 128)

    # Keep >= 2 feature tiles once C >= 256 so dimension_semantics=("parallel",)
    # can shard the grid across v7x's two TensorCores (costs nothing on the
    # single-TC v5e/v6e generations).
    min_tiles = 2 if c_pad >= 256 else 1

    nblk = c_pad // 128
    best = 128
    for k in range(1, nblk + 1):
        if nblk % k:
            continue
        tile = 128 * k
        if tile <= max_tile and (nblk // k) >= min_tiles:
            best = tile
    return best


def vdp_batchnorm(mu, sigma, eps=1e-5):
    """Forward pass of VDP_BatchNorm. mu, sigma: (N, C) arrays."""
    assert mu.shape == sigma.shape and mu.ndim == 2
    N, C = mu.shape
    assert N >= 2, "torch.var(mu, 0) (unbiased) requires at least 2 samples"

    # Lane-dense padding of the feature axis to a multiple of 128. Padded
    # columns are zeros -> var=0, outputs 0, sliced away afterwards.
    C_pad = ((C + 127) // 128) * 128
    if C_pad != C:
        pad = C_pad - C
        mu_p = jnp.pad(mu, ((0, 0), (0, pad)))
        sigma_p = jnp.pad(sigma, ((0, 0), (0, pad)))
    else:
        mu_p, sigma_p = mu, sigma

    in_itemsize = max(jnp.dtype(mu.dtype).itemsize, jnp.dtype(sigma.dtype).itemsize)
    out_itemsize = in_itemsize  # outputs keep the input dtypes

    vmem_cap = _vmem_capacity_bytes()
    vmem_limit = (vmem_cap * 3) // 4   # ~25% headroom for the compiler
    tile_budget = vmem_cap // 2        # what the tile chooser may spend

    tile_c = _choose_tile_c(C_pad, N, in_itemsize, out_itemsize, tile_budget)
    grid = (C_pad // tile_c,)

    # TODO(synk): huge-N / tiny-C shapes (e.g. N=65536, C=32) need a two-pass
    # scheme (resident (1, C) sum/sum-sq accumulator over an N-grid + a second
    # elementwise pass); not implemented — the minimum (N, 128) block must fit.

    kernel = functools.partial(_vdp_batchnorm_kernel, eps=eps, n=N)
    spec = pl.BlockSpec((N, tile_c), lambda j: (0, j))

    bytes_accessed = (2 * N * C_pad * jnp.dtype(mu.dtype).itemsize
                      + 2 * N * C_pad * jnp.dtype(sigma.dtype).itemsize)

    mu_bn, sigma_bn = pl.pallas_call(
        kernel,
        out_shape=(
            jax.ShapeDtypeStruct((N, C_pad), mu.dtype),
            jax.ShapeDtypeStruct((N, C_pad), sigma.dtype),
        ),
        grid=grid,
        in_specs=[spec, spec],
        out_specs=(spec, spec),
        compiler_params=pltpu.CompilerParams(
            dimension_semantics=("parallel",),  # feature tiles independent
            vmem_limit_bytes=int(vmem_limit),
        ),
        cost_estimate=pl.CostEstimate(
            flops=8 * N * C_pad,
            transcendentals=C_pad,
            bytes_accessed=bytes_accessed,
        ),
    )(mu_p, sigma_p)

    if C_pad != C:
        mu_bn = mu_bn[:, :C]
        sigma_bn = sigma_bn[:, :C]
    return mu_bn, sigma_bn


def _reference(mu, sigma, eps=1e-5):
    mean = jnp.mean(mu, axis=0, keepdims=True)
    var_b = jnp.mean((mu - mean) ** 2, axis=0, keepdims=True)
    mu_bn = (mu - mean) / jnp.sqrt(var_b + eps)
    var_u = jnp.sum((mu - mean) ** 2, axis=0, keepdims=True) / (mu.shape[0] - 1)
    sigma_bn = sigma * (1.0 / (var_u + eps))
    return mu_bn, sigma_bn


def _run_case(key, N, C, eps=1e-5):
    k_mu, k_sigma = jax.random.split(key)
    mu = jax.random.normal(k_mu, (N, C), dtype=jnp.float32)
    # sigma is a (co)variance-like quantity -> keep it positive.
    sigma = jax.random.uniform(k_sigma, (N, C), dtype=jnp.float32,
                               minval=0.1, maxval=2.0)

    mu_bn, sigma_bn = vdp_batchnorm(mu, sigma, eps=eps)
    jax.block_until_ready((mu_bn, sigma_bn))

    mu_ref, sigma_ref = _reference(mu, sigma, eps=eps)
    assert jnp.allclose(mu_bn, mu_ref, atol=1e-5, rtol=1e-5)
    assert jnp.allclose(sigma_bn, sigma_ref, atol=1e-5, rtol=1e-4)


if __name__ == "__main__":
    key = jax.random.PRNGKey(0)
    k0, k1 = jax.random.split(key)

    # Small shape matching the module's BatchNorm1d (N, num_features) layout;
    # exercises the pad-to-128 lane-dense path.
    _run_case(k0, N=8, C=32)
    # Lane-dense shape that exercises the tiled (multi-block, megacore) path.
    _run_case(k1, N=16, C=1024)

    print("KERNEL_OK")
</pallas_src>

<mosaic_0001>
module attributes {stable_mosaic.version = 11 : i64} {
  func.func @_vdp_batchnorm_kernel(%arg0: i32, %arg1: memref<8x128xf32, #tpu.memory_space<vmem>>, %arg2: memref<8x128xf32, #tpu.memory_space<vmem>>, %arg3: memref<8x128xf32, #tpu.memory_space<vmem>>, %arg4: memref<8x128xf32, #tpu.memory_space<vmem>>) attributes {dimension_semantics = [#tpu.dimension_semantics<parallel>], iteration_bounds = array<i64: 1>, scalar_prefetch = 0 : i64, scratch_operands = 0 : i64, tpu.core_type = #tpu.core_type<tc>, window_params = [{transform_indices = @transform_0, window_bounds = array<i64: 8, 128>}, {transform_indices = @transform_1, window_bounds = array<i64: 8, 128>}, {transform_indices = @transform_2, window_bounds = array<i64: 8, 128>}, {transform_indices = @transform_3, window_bounds = array<i64: 8, 128>}]} {
    %c0 = arith.constant 0 : index
    %c0_0 = arith.constant 0 : index
    %0 = vector.load %arg1[%c0, %c0_0] : memref<8x128xf32, #tpu.memory_space<vmem>>, vector<8x128xf32>
    %c0_1 = arith.constant 0 : index
    %c0_2 = arith.constant 0 : index
    %1 = vector.load %arg2[%c0_1, %c0_2] : memref<8x128xf32, #tpu.memory_space<vmem>>, vector<8x128xf32>
    %cst = arith.constant dense<0.000000e+00> : vector<128xf32>
    %2 = vector.multi_reduction <add>, %0, %cst [0] : vector<8x128xf32> to vector<128xf32>
    %3 = vector.shape_cast %2 : vector<128xf32> to vector<1x128xf32>
    %cst_3 = arith.constant 1.250000e-01 : f32
    %4 = vector.broadcast %cst_3 : f32 to vector<1x128xf32>
    %5 = arith.mulf %3, %4 : vector<1x128xf32>
    %6 = vector.broadcast %5 : vector<1x128xf32> to vector<8x128xf32>
    %7 = arith.subf %0, %6 : vector<8x128xf32>
    %8 = arith.mulf %7, %7 : vector<8x128xf32>
    %cst_4 = arith.constant dense<0.000000e+00> : vector<128xf32>
    %9 = vector.multi_reduction <add>, %8, %cst_4 [0] : vector<8x128xf32> to vector<128xf32>
    %10 = vector.shape_cast %9 : vector<128xf32> to vector<1x128xf32>
    %cst_5 = arith.constant 1.250000e-01 : f32
    %11 = vector.broadcast %cst_5 : f32 to vector<1x128xf32>
    %12 = arith.mulf %10, %11 : vector<1x128xf32>
    %cst_6 = arith.constant 9.99999974E-6 : f32
    %13 = vector.broadcast %cst_6 : f32 to vector<1x128xf32>
    %14 = arith.addf %12, %13 : vector<1x128xf32>
    %15 = math.rsqrt %14 : vector<1x128xf32>
    %16 = vector.broadcast %15 : vector<1x128xf32> to vector<8x128xf32>
    %17 = arith.mulf %7, %16 : vector<8x128xf32>
    %cst_7 = arith.constant 0.142857149 : f32
    %18 = vector.broadcast %cst_7 : f32 to vector<1x128xf32>
    %19 = arith.mulf %10, %18 : vector<1x128xf32>
    %cst_8 = arith.constant 9.99999974E-6 : f32
    %20 = vector.broadcast %cst_8 : f32 to vector<1x128xf32>
    %21 = arith.addf %19, %20 : vector<1x128xf32>
    %22 = vector.broadcast %21 : vector<1x128xf32> to vector<8x128xf32>
    %23 = arith.divf %1, %22 : vector<8x128xf32>
    %c0_9 = arith.constant 0 : index
    %c0_10 = arith.constant 0 : index
    %24 = vector.load %arg3[%c0_9, %c0_10] : memref<8x128xf32, #tpu.memory_space<vmem>>, vector<8x128xf32>
    tpu.vector_store %arg3[%c0_9, %c0_10], %17 {strides = array<i32>} : memref<8x128xf32, #tpu.memory_space<vmem>>, vector<8x128xf32>,
    %c0_11 = arith.constant 0 : index
    %c0_12 = arith.constant 0 : index
    %25 = vector.load %arg4[%c0_11, %c0_12] : memref<8x128xf32, #tpu.memory_space<vmem>>, vector<8x128xf32>
    tpu.vector_store %arg4[%c0_11, %c0_12], %23 {strides = array<i32>} : memref<8x128xf32, #tpu.memory_space<vmem>>, vector<8x128xf32>,
    return
  }
  func.func @transform_0(%arg0: i32) -> (i32, i32) {
    %c0_i32 = arith.constant 0 : i32
    %c0_i32_0 = arith.constant 0 : i32
    return %c0_i32, %arg0 : i32, i32
  }
  func.func @transform_1(%arg0: i32) -> (i32, i32) {
    %c0_i32 = arith.constant 0 : i32
    %c0_i32_0 = arith.constant 0 : i32
    return %c0_i32, %arg0 : i32, i32
  }
  func.func @transform_2(%arg0: i32) -> (i32, i32) {
    %c0_i32 = arith.constant 0 : i32
    %c0_i32_0 = arith.constant 0 : i32
    return %c0_i32, %arg0 : i32, i32
  }
  func.func @transform_3(%arg0: i32) -> (i32, i32) {
    %c0_i32 = arith.constant 0 : i32
    %c0_i32_0 = arith.constant 0 : i32
    return %c0_i32, %arg0 : i32, i32
  }
}

</mosaic_0001>

<llo_original>
// kernel: tpu_custom_call.1
$region0: #{tpu_custom_call.1}
  #allocation0 [shape = 'u32[]', space=smem, size = 0x4, offset = 0x4, fixed_abs, tag = 'smem constant byte address 0x4 - core index']
  #allocation1 [shape = 'u32[144,128]{1,0:T(1,128)}', space=vmem, size = 0x12000, scoped, tag = 'internal scratch']
  %s0 = inlined_call_operand.hbm [shape: f32[8,128], index: 0, kind: input, shape index: {}]
  %s1 = inlined_call_operand.hbm [shape: f32[8,128], index: 1, kind: input, shape index: {}]
  %s2 = inlined_call_operand.hbm [shape: f32[8,128], index: 2, kind: output, shape index: {0}]
  %s3 = inlined_call_operand.hbm [shape: f32[8,128], index: 3, kind: output, shape index: {1}]
  %4 = xla_tuple %s2, %s3
  %s5 = sld [smem:[#allocation0]]
  $region34: #{tpu_custom_call.1} parent=0
    _
  %s7 = ssub.s32 1, %s5
  %s8 = scalar_select 0, %s7, %s5
  $region1: #{tpu_custom_call.1} parent=0
    #allocation2 [shape = 'u8[4096]{0}', space=vmem, size = 0x1000, scoped, tag = 'input window, operand 0, single buffered']
    #allocation3 [shape = 's32[1]{0}', space=sflag, size = 0x4, scoped, tag = 'scoped memory for tpu_custom_call.1']
    #allocation4 [shape = 's32[1]{0}', space=sflag, size = 0x4, scoped, tag = 'scoped memory for tpu_custom_call.1']
    #allocation5 [shape = 'u8[4096]{0}', space=vmem, size = 0x1000, scoped, tag = 'input window, operand 1, single buffered']
    #allocation6 [shape = 's32[1]{0}', space=sflag, size = 0x4, scoped, tag = 'scoped memory for tpu_custom_call.1']
    #allocation7 [shape = 'u8[4096]{0}', space=vmem, size = 0x1000, scoped, tag = 'output window, operand 0, single buffered']
    #allocation8 [shape = 'u8[4096]{0}', space=vmem, size = 0x1000, scoped, tag = 'output window, operand 1, single buffered']
    #allocation9 [shape = 's32[1]{0}', space=sflag, size = 0x4, scoped, tag = 'scoped memory for tpu_custom_call.1']
    %9 = vsyncpa [#allocation3], 0
    %10 = vsyncpa [#allocation6], 0
    %11 = vsyncpa [#allocation4], 0
    %12 = vsyncpa [#allocation9], 0
    // Predicated region
    $region2: #{tpu_custom_call.1} parent=1 // pred_check
      _
    $region3: #{tpu_custom_call.1} parent=1 // pred_check_branch
      %14 = sbr.rel (0) target = $region5
    $region4: #{tpu_custom_call.1} parent=1 // pred_region
      %s16 = ssub.s32 128, 128
      %17 = vsyncadd [#allocation3], %s16
      %s19 = sshll.u32 [#allocation2], 4
      %s20 = int_to_ptr.vmem [resolvable:$true] %s19
      %22 = dma.hbm_to_vmem [thread:$0]  %s0, 128, %s20, [#allocation3]
    $region5: #{tpu_custom_call.1} parent=1 // pred_fallthru
      _
    // Predicated region
    $region6: #{tpu_custom_call.1} parent=1 // pred_check
      _
    $region7: #{tpu_custom_call.1} parent=1 // pred_check_branch
      %24 = sbr.rel (0) target = $region9
    $region8: #{tpu_custom_call.1} parent=1 // pred_region
      %s26 = ssub.s32 128, 128
      %27 = vsyncadd [#allocation6], %s26
      %s29 = sshll.u32 [#allocation5], 4
      %s30 = int_to_ptr.vmem [resolvable:$true] %s29
      %32 = dma.hbm_to_vmem [thread:$0]  %s1, 128, %s30, [#allocation6]
    $region9: #{tpu_custom_call.1} parent=1 // pred_fallthru
      _
    // Predicated region
    $region10: #{tpu_custom_call.1} parent=1 // pred_check
      _
    $region11: #{tpu_custom_call.1} parent=1 // pred_check_branch
      %34 = sbr.rel (0) target = $region13
    $region12: #{tpu_custom_call.1} parent=1 // pred_region
      %35 = dma.done [#allocation3], 128
    $region13: #{tpu_custom_call.1} parent=1 // pred_fallthru
      _
    // Predicated region
    $region14: #{tpu_custom_call.1} parent=1 // pred_check
      _
    $region15: #{tpu_custom_call.1} parent=1 // pred_check_branch
      %37 = sbr.rel (0) target = $region17
    $region16: #{tpu_custom_call.1} parent=1 // pred_region
      %38 = dma.done [#allocation6], 128
    $region17: #{tpu_custom_call.1} parent=1 // pred_fallthru
      _
    %v39 = vld [vmem:[#allocation2] sm:$0xff]
    %v40 = vld [vmem:[#allocation5] sm:$0xff]
    %v41 = vrot.slane %v39, 4
    %v42 = vadd.f32 %v39, %v41
    %v43 = vrot.slane %v42, 2
    %v44 = vadd.f32 %v42, %v43
    %v45 = vrot.slane %v44, 1
    %v46 = vadd.f32 %v44, %v45
    %v47 = vmul.f32 %v46, 0.125
    %v48 = vsub.f32 %v39, %v47
    %v49 = vmul.f32 %v48, %v48
    %v50 = vrot.slane %v49, 4
    %v51 = vadd.f32 %v49, %v50
    %v52 = vrot.slane %v51, 2
    %v53 = vadd.f32 %v51, %v52
    %v54 = vrot.slane %v53, 1
    %v55 = vadd.f32 %v53, %v54
    %v56 = vmul.f32 %v55, 0.125
    %v57 = vadd.f32 %v56, 1e-05
    %v58 = vrsqrt.pop %v57
    %v59 = vmul.f32 %v48, %v58
    %v60 = vmul.f32 %v55, 0.14285715
    %v61 = vadd.f32 %v60, 1e-05
    %v62 = vrcp.pop %v61
    %v63 = vmul.f32 %v40, %v62
    %64 = vst [vmem:[#allocation7] sm:$0xff] %v59
    %65 = vst [vmem:[#allocation8] sm:$0xff] %v63
    // Predicated region
    $region18: #{tpu_custom_call.1} parent=1 // pred_check
      _
    $region19: #{tpu_custom_call.1} parent=1 // pred_check_branch
      %67 = sbr.rel (0) target = $region21
    $region20: #{tpu_custom_call.1} parent=1 // pred_region
      %s69 = ssub.s32 128, 128
      %70 = vsyncadd [#allocation4], %s69
      %s72 = sshll.u32 [#allocation7], 4
      %s73 = int_to_ptr.vmem [resolvable:$true] %s72
      %75 = dma.vmem_to_hbm [thread:$0]  %s73, 128, %s2, [#allocation4]
    $region21: #{tpu_custom_call.1} parent=1 // pred_fallthru
      _
    // Predicated region
    $region22: #{tpu_custom_call.1} parent=1 // pred_check
      _
    $region23: #{tpu_custom_call.1} parent=1 // pred_check_branch
      %77 = sbr.rel (0) target = $region25
    $region24: #{tpu_custom_call.1} parent=1 // pred_region
      %s79 = ssub.s32 128, 128
      %80 = vsyncadd [#allocation9], %s79
      %s82 = sshll.u32 [#allocation8], 4
      %s83 = int_to_ptr.vmem [resolvable:$true] %s82
      %85 = dma.vmem_to_hbm [thread:$0]  %s83, 128, %s3, [#allocation9]
    $region25: #{tpu_custom_call.1} parent=1 // pred_fallthru
      _
    // Predicated region
    $region26: #{tpu_custom_call.1} parent=1 // pred_check
      _
    $region27: #{tpu_custom_call.1} parent=1 // pred_check_branch
      %87 = sbr.rel (0) target = $region29
    $region28: #{tpu_custom_call.1} parent=1 // pred_region
      %88 = dma.done [#allocation4], 128
    $region29: #{tpu_custom_call.1} parent=1 // pred_fallthru
      _
    // Predicated region
    $region30: #{tpu_custom_call.1} parent=1 // pred_check
      _
    $region31: #{tpu_custom_call.1} parent=1 // pred_check_branch
      %90 = sbr.rel (0) target = $region33
    $region32: #{tpu_custom_call.1} parent=1 // pred_region
      %91 = dma.done [#allocation9], 128
    $region33: #{tpu_custom_call.1} parent=1 // pred_fallthru
      _
    %92 = vsyncpa [#allocation3], 1
    %93 = vsyncpa [#allocation6], 1
    %94 = vsyncpa [#allocation4], 1
    %95 = vsyncpa [#allocation9], 1

</llo_original>
